<compile_context>
chip_gen: v7x
topology: tpu7x:2x2x1
jax: 0.10.0
libtpu: 0.0.40
codegen_flags: <defaults>
</compile_context>

<pallas_src>
import jax
import jax.numpy as jnp
from jax.experimental import pallas as pl
from jax.experimental.pallas import tpu as pltpu

LANE = 128           # TPU vreg lane width
DEFAULT_TILE_B = 2048  # batch rows per grid step (fits default scoped VMEM on v5e/v6e/v7x)


def _round_up(n, m):
    return ((n + m - 1) // m) * m


def fc_medium_kernel(x_ref,
                     w1_ref, b1_ref,
                     w2_ref, b2_ref,
                     w3_ref, b3_ref,
                     w4_ref, b4_ref,
                     o_ref):
    """One batch tile of the fused 4-layer MLP.

    x_ref : (TILE_B, 2)      f32, batch tile
    w*_ref: [in, out] weights (resident in VMEM across all grid steps)
    b*_ref: (1, out) biases
    o_ref : (TILE_B, 128)    lane-dense padded output (cols >= 10 are zero-weight)
    """
    x = x_ref[...]                                   # (TILE_B, 2) f32

    # --- Layer 1: K=2 contraction as VPU broadcast-FMAs (skip the MXU entirely) ---
    w1 = w1_ref[...]                                 # (2, 8)
    h = b1_ref[...]                                  # (1, 8) broadcasts over batch
    for k in range(x.shape[1]):                      # static python loop, K=2
        h = h + x[:, k:k + 1] * w1[k:k + 1, :]
    h = jnp.tanh(h)

    # --- Layers 2, 3: 8x8 matmuls on the MXU ---
    h = jnp.tanh(jnp.dot(h, w2_ref[...], preferred_element_type=jnp.float32)
                 + b2_ref[...])
    h = jnp.tanh(jnp.dot(h, w3_ref[...], preferred_element_type=jnp.float32)
                 + b3_ref[...])

    # --- Classifier: N padded to 128 lanes -> unmasked, lane-dense stores ---
    out = jnp.dot(h, w4_ref[...], preferred_element_type=jnp.float32) + b4_ref[...]
    o_ref[...] = out.astype(o_ref.dtype)


def fc_medium_forward(x, params, tile_b=DEFAULT_TILE_B):
    """Flatten (PyTorch view(B, -1)) + fused batch-tiled MLP kernel."""
    w1, b1, w2, b2, w3, b3, w4, b4 = params

    B = x.shape[0]
    x_flat = x.reshape(B, -1).astype(jnp.float32)    # Flatten
    in_features = x_flat.shape[1]
    out_channels = w4.shape[1]

    # Pad classifier weight/bias to a full 128-lane output slab (zero columns).
    n_pad = _round_up(out_channels, LANE)
    w4p = jnp.zeros((w4.shape[0], n_pad), jnp.float32).at[:, :out_channels].set(w4)
    b4p = jnp.zeros((1, n_pad), jnp.float32).at[:, :out_channels].set(b4)

    # Batch tile: multiple of 8 sublanes, capped by tile_b; pad batch to a multiple.
    tile_b = min(tile_b, _round_up(B, 8))
    padded_B = _round_up(B, tile_b)
    if padded_B != B:
        x_flat = jnp.pad(x_flat, ((0, padded_B - B), (0, 0)))

    grid = (padded_B // tile_b,)

    def batch_tile(shape):
        # tiled along the batch grid axis
        return pl.BlockSpec(shape, lambda i: (i, 0))

    def resident(shape):
        # constant index_map -> weight/bias stays resident in VMEM across steps
        return pl.BlockSpec(shape, lambda i: (0, 0))

    out_padded = pl.pallas_call(
        fc_medium_kernel,
        out_shape=jax.ShapeDtypeStruct((padded_B, n_pad), jnp.float32),
        grid_spec=pltpu.PrefetchScalarGridSpec(
            num_scalar_prefetch=0,
            grid=grid,
            in_specs=[
                batch_tile((tile_b, in_features)),
                resident(w1.shape), resident(b1.shape),
                resident(w2.shape), resident(b2.shape),
                resident(w3.shape), resident(b3.shape),
                resident(w4p.shape), resident(b4p.shape),
            ],
            out_specs=batch_tile((tile_b, n_pad)),
        ),
        compiler_params=pltpu.CompilerParams(
            dimension_semantics=("parallel",),   # shard batch grid across TCs on v7x
        ),
    )(x_flat, w1, b1, w2, b2, w3, b3, w4p, b4p)

    return out_padded[:B, :out_channels]


def init_params(key, input_size=2, h1=8, h2=8, h3=8, output_channels=10):
    """Deterministic PyTorch-style (uniform +-1/sqrt(fan_in)) parameter init.

    Weights stored as [in_features, out_features]; biases as [1, out_features].
    """
    def linear_init(k, fan_in, fan_out):
        kw, kb = jax.random.split(k)
        bound = 1.0 / jnp.sqrt(fan_in)
        w = jax.random.uniform(kw, (fan_in, fan_out), jnp.float32, -bound, bound)
        b = jax.random.uniform(kb, (1, fan_out), jnp.float32, -bound, bound)
        return w, b

    k1, k2, k3, k4 = jax.random.split(key, 4)
    w1, b1 = linear_init(k1, input_size, h1)
    w2, b2 = linear_init(k2, h1, h2)
    w3, b3 = linear_init(k3, h2, h3)
    w4, b4 = linear_init(k4, h3, output_channels)
    return (w1, b1, w2, b2, w3, b3, w4, b4)


def fc_medium_ref(x, params):
    """Pure-JAX reference for correctness checking."""
    w1, b1, w2, b2, w3, b3, w4, b4 = params
    h = x.reshape(x.shape[0], -1).astype(jnp.float32)
    h = jnp.tanh(h @ w1 + b1)
    h = jnp.tanh(h @ w2 + b2)
    h = jnp.tanh(h @ w3 + b3)
    return h @ w4 + b4


if __name__ == "__main__":
    key = jax.random.PRNGKey(0)
    key_x, key_p = jax.random.split(key)

    batch = 8
    input_size = 2  # FC_medium.expected_input_size
    x = jax.random.normal(key_x, (batch, input_size), jnp.float32)

    params = init_params(key_p, input_size=input_size, output_channels=10)

    out = fc_medium_forward(x, params)
    out = jax.block_until_ready(out)

    ref = fc_medium_ref(x, params)
    assert out.shape == (batch, 10), out.shape
    assert jnp.allclose(out, ref, atol=1e-5, rtol=1e-5), "mismatch vs reference"

    print("KERNEL_OK")
</pallas_src>

<mosaic_0001>
module attributes {stable_mosaic.version = 11 : i64} {
  func.func @fc_medium_kernel(%arg0: i32, %arg1: memref<8x2xf32, #tpu.memory_space<vmem>>, %arg2: memref<2x8xf32, #tpu.memory_space<vmem>>, %arg3: memref<1x8xf32, #tpu.memory_space<vmem>>, %arg4: memref<8x8xf32, #tpu.memory_space<vmem>>, %arg5: memref<1x8xf32, #tpu.memory_space<vmem>>, %arg6: memref<8x8xf32, #tpu.memory_space<vmem>>, %arg7: memref<1x8xf32, #tpu.memory_space<vmem>>, %arg8: memref<8x128xf32, #tpu.memory_space<vmem>>, %arg9: memref<1x128xf32, #tpu.memory_space<vmem>>, %arg10: memref<8x128xf32, #tpu.memory_space<vmem>>) attributes {dimension_semantics = [#tpu.dimension_semantics<parallel>], iteration_bounds = array<i64: 1>, scalar_prefetch = 0 : i64, scratch_operands = 0 : i64, tpu.core_type = #tpu.core_type<tc>, window_params = [{transform_indices = @transform_0, window_bounds = array<i64: 8, 2>}, {pipeline_mode = #tpu.pipeline_mode<synchronous>, transform_indices = @transform_1, window_bounds = array<i64: 2, 8>}, {pipeline_mode = #tpu.pipeline_mode<synchronous>, transform_indices = @transform_2, window_bounds = array<i64: 1, 8>}, {pipeline_mode = #tpu.pipeline_mode<synchronous>, transform_indices = @transform_3, window_bounds = array<i64: 8, 8>}, {pipeline_mode = #tpu.pipeline_mode<synchronous>, transform_indices = @transform_4, window_bounds = array<i64: 1, 8>}, {pipeline_mode = #tpu.pipeline_mode<synchronous>, transform_indices = @transform_5, window_bounds = array<i64: 8, 8>}, {pipeline_mode = #tpu.pipeline_mode<synchronous>, transform_indices = @transform_6, window_bounds = array<i64: 1, 8>}, {pipeline_mode = #tpu.pipeline_mode<synchronous>, transform_indices = @transform_7, window_bounds = array<i64: 8, 128>}, {pipeline_mode = #tpu.pipeline_mode<synchronous>, transform_indices = @transform_8, window_bounds = array<i64: 1, 128>}, {transform_indices = @transform_9, window_bounds = array<i64: 8, 128>}]} {
    %c0 = arith.constant 0 : index
    %c0_0 = arith.constant 0 : index
    %0 = vector.load %arg1[%c0, %c0_0] : memref<8x2xf32, #tpu.memory_space<vmem>>, vector<8x2xf32>
    %c0_1 = arith.constant 0 : index
    %c0_2 = arith.constant 0 : index
    %1 = vector.load %arg2[%c0_1, %c0_2] : memref<2x8xf32, #tpu.memory_space<vmem>>, vector<2x8xf32>
    %c0_3 = arith.constant 0 : index
    %c0_4 = arith.constant 0 : index
    %2 = vector.load %arg3[%c0_3, %c0_4] : memref<1x8xf32, #tpu.memory_space<vmem>>, vector<1x8xf32>
    %3 = vector.extract_strided_slice %0 {offsets = [0, 0], sizes = [8, 1], strides = [1, 1]} : vector<8x2xf32> to vector<8x1xf32>
    %4 = vector.extract_strided_slice %1 {offsets = [0, 0], sizes = [1, 8], strides = [1, 1]} : vector<2x8xf32> to vector<1x8xf32>
    %5 = vector.broadcast %3 : vector<8x1xf32> to vector<8x8xf32>
    %6 = vector.broadcast %4 : vector<1x8xf32> to vector<8x8xf32>
    %7 = arith.mulf %5, %6 : vector<8x8xf32>
    %8 = vector.broadcast %2 : vector<1x8xf32> to vector<8x8xf32>
    %9 = arith.addf %8, %7 : vector<8x8xf32>
    %10 = vector.extract_strided_slice %0 {offsets = [0, 1], sizes = [8, 1], strides = [1, 1]} : vector<8x2xf32> to vector<8x1xf32>
    %11 = vector.extract_strided_slice %1 {offsets = [1, 0], sizes = [1, 8], strides = [1, 1]} : vector<2x8xf32> to vector<1x8xf32>
    %12 = vector.broadcast %10 : vector<8x1xf32> to vector<8x8xf32>
    %13 = vector.broadcast %11 : vector<1x8xf32> to vector<8x8xf32>
    %14 = arith.mulf %12, %13 : vector<8x8xf32>
    %15 = arith.addf %9, %14 : vector<8x8xf32>
    %16 = math.tanh %15 : vector<8x8xf32>
    %c0_5 = arith.constant 0 : index
    %c0_6 = arith.constant 0 : index
    %17 = vector.load %arg4[%c0_5, %c0_6] : memref<8x8xf32, #tpu.memory_space<vmem>>, vector<8x8xf32>
    %cst = arith.constant dense<0.000000e+00> : vector<8x8xf32>
    %18 = tpu.matmul %16, %17, %cst {dimension_numbers = #tpu.dot_dimension_numbers<[1], [0], [0], [1], [0, 0, 1, 1], [], []>} : vector<8x8xf32>, vector<8x8xf32>, vector<8x8xf32> -> vector<8x8xf32>
    %c0_7 = arith.constant 0 : index
    %c0_8 = arith.constant 0 : index
    %19 = vector.load %arg5[%c0_7, %c0_8] : memref<1x8xf32, #tpu.memory_space<vmem>>, vector<1x8xf32>
    %20 = vector.broadcast %19 : vector<1x8xf32> to vector<8x8xf32>
    %21 = arith.addf %18, %20 : vector<8x8xf32>
    %22 = math.tanh %21 : vector<8x8xf32>
    %c0_9 = arith.constant 0 : index
    %c0_10 = arith.constant 0 : index
    %23 = vector.load %arg6[%c0_9, %c0_10] : memref<8x8xf32, #tpu.memory_space<vmem>>, vector<8x8xf32>
    %cst_11 = arith.constant dense<0.000000e+00> : vector<8x8xf32>
    %24 = tpu.matmul %22, %23, %cst_11 {dimension_numbers = #tpu.dot_dimension_numbers<[1], [0], [0], [1], [0, 0, 1, 1], [], []>} : vector<8x8xf32>, vector<8x8xf32>, vector<8x8xf32> -> vector<8x8xf32>
    %c0_12 = arith.constant 0 : index
    %c0_13 = arith.constant 0 : index
    %25 = vector.load %arg7[%c0_12, %c0_13] : memref<1x8xf32, #tpu.memory_space<vmem>>, vector<1x8xf32>
    %26 = vector.broadcast %25 : vector<1x8xf32> to vector<8x8xf32>
    %27 = arith.addf %24, %26 : vector<8x8xf32>
    %28 = math.tanh %27 : vector<8x8xf32>
    %c0_14 = arith.constant 0 : index
    %c0_15 = arith.constant 0 : index
    %29 = vector.load %arg8[%c0_14, %c0_15] : memref<8x128xf32, #tpu.memory_space<vmem>>, vector<8x128xf32>
    %cst_16 = arith.constant dense<0.000000e+00> : vector<8x128xf32>
    %30 = tpu.matmul %28, %29, %cst_16 {dimension_numbers = #tpu.dot_dimension_numbers<[1], [0], [0], [1], [0, 0, 1, 1], [], []>} : vector<8x8xf32>, vector<8x128xf32>, vector<8x128xf32> -> vector<8x128xf32>
    %c0_17 = arith.constant 0 : index
    %c0_18 = arith.constant 0 : index
    %31 = vector.load %arg9[%c0_17, %c0_18] : memref<1x128xf32, #tpu.memory_space<vmem>>, vector<1x128xf32>
    %32 = vector.broadcast %31 : vector<1x128xf32> to vector<8x128xf32>
    %33 = arith.addf %30, %32 : vector<8x128xf32>
    %c0_19 = arith.constant 0 : index
    %c0_20 = arith.constant 0 : index
    %34 = vector.load %arg10[%c0_19, %c0_20] : memref<8x128xf32, #tpu.memory_space<vmem>>, vector<8x128xf32>
    tpu.vector_store %arg10[%c0_19, %c0_20], %33 {strides = array<i32>} : memref<8x128xf32, #tpu.memory_space<vmem>>, vector<8x128xf32>,
    return
  }
  func.func @transform_0(%arg0: i32) -> (i32, i32) {
    %c0_i32 = arith.constant 0 : i32
    %c0_i32_0 = arith.constant 0 : i32
    return %arg0, %c0_i32 : i32, i32
  }
  func.func @transform_1(%arg0: i32) -> (i32, i32) {
    %c0_i32 = arith.constant 0 : i32
    %c0_i32_0 = arith.constant 0 : i32
    %c0_i32_1 = arith.constant 0 : i32
    return %c0_i32, %c0_i32_0 : i32, i32
  }
  func.func @transform_2(%arg0: i32) -> (i32, i32) {
    %c0_i32 = arith.constant 0 : i32
    %c0_i32_0 = arith.constant 0 : i32
    %c0_i32_1 = arith.constant 0 : i32
    return %c0_i32, %c0_i32_0 : i32, i32
  }
  func.func @transform_3(%arg0: i32) -> (i32, i32) {
    %c0_i32 = arith.constant 0 : i32
    %c0_i32_0 = arith.constant 0 : i32
    %c0_i32_1 = arith.constant 0 : i32
    return %c0_i32, %c0_i32_0 : i32, i32
  }
  func.func @transform_4(%arg0: i32) -> (i32, i32) {
    %c0_i32 = arith.constant 0 : i32
    %c0_i32_0 = arith.constant 0 : i32
    %c0_i32_1 = arith.constant 0 : i32
    return %c0_i32, %c0_i32_0 : i32, i32
  }
  func.func @transform_5(%arg0: i32) -> (i32, i32) {
    %c0_i32 = arith.constant 0 : i32
    %c0_i32_0 = arith.constant 0 : i32
    %c0_i32_1 = arith.constant 0 : i32
    return %c0_i32, %c0_i32_0 : i32, i32
  }
  func.func @transform_6(%arg0: i32) -> (i32, i32) {
    %c0_i32 = arith.constant 0 : i32
    %c0_i32_0 = arith.constant 0 : i32
    %c0_i32_1 = arith.constant 0 : i32
    return %c0_i32, %c0_i32_0 : i32, i32
  }
  func.func @transform_7(%arg0: i32) -> (i32, i32) {
    %c0_i32 = arith.constant 0 : i32
    %c0_i32_0 = arith.constant 0 : i32
    %c0_i32_1 = arith.constant 0 : i32
    return %c0_i32, %c0_i32_0 : i32, i32
  }
  func.func @transform_8(%arg0: i32) -> (i32, i32) {
    %c0_i32 = arith.constant 0 : i32
    %c0_i32_0 = arith.constant 0 : i32
    %c0_i32_1 = arith.constant 0 : i32
    return %c0_i32, %c0_i32_0 : i32, i32
  }
  func.func @transform_9(%arg0: i32) -> (i32, i32) {
    %c0_i32 = arith.constant 0 : i32
    %c0_i32_0 = arith.constant 0 : i32
    return %arg0, %c0_i32 : i32, i32
  }
}

</mosaic_0001>

<llo_original>
// kernel: tpu_custom_call.1
$region0: #{tpu_custom_call.1}
  #allocation0 [shape = 'u32[]', space=smem, size = 0x4, offset = 0x4, fixed_abs, tag = 'smem constant byte address 0x4 - core index']
  #allocation1 [shape = 'u32[144,128]{1,0:T(1,128)}', space=vmem, size = 0x12000, scoped, tag = 'internal scratch']
  %s0 = inlined_call_operand.vmem [shape: f32[8,2], index: 0, kind: input, shape index: {}]
  %s1 = inlined_call_operand.hbm [shape: f32[2,8], index: 1, kind: input, shape index: {}]
  %s2 = inlined_call_operand.vmem [shape: f32[1,8], index: 2, kind: input, shape index: {}]
  %s3 = inlined_call_operand.vmem [shape: f32[8,8], index: 3, kind: input, shape index: {}]
  %s4 = inlined_call_operand.hbm [shape: f32[1,8], index: 4, kind: input, shape index: {}]
  %s5 = inlined_call_operand.vmem [shape: f32[8,8], index: 5, kind: input, shape index: {}]
  %s6 = inlined_call_operand.vmem [shape: f32[1,8], index: 6, kind: input, shape index: {}]
  %s7 = inlined_call_operand.vmem [shape: f32[8,128], index: 7, kind: input, shape index: {}]
  %s8 = inlined_call_operand.vmem [shape: f32[1,128], index: 8, kind: input, shape index: {}]
  %s9 = inlined_call_operand.hbm [shape: f32[8,128], index: 9, kind: output, shape index: {}]
  %s10 = sld [smem:[#allocation0]]
  $region54: #{tpu_custom_call.1} parent=0
    _
  %s12 = ssub.s32 1, %s10
  %s13 = scalar_select 0, %s12, %s10
  $region1: #{tpu_custom_call.1} parent=0
    #allocation2 [shape = 'u8[1024]{0}', space=vmem, size = 0x400, scoped, tag = 'input window, operand 1, single buffered']
    #allocation3 [shape = 's32[1]{0}', space=sflag, size = 0x4, scoped, tag = 'scoped memory for tpu_custom_call.1']
    #allocation4 [shape = 's32[1]{0}', space=sflag, size = 0x4, scoped, tag = 'scoped memory for tpu_custom_call.1']
    #allocation5 [shape = 'u8[512]{0}', space=vmem, size = 0x400, scoped, tag = 'input window, operand 4, single buffered']
    #allocation6 [shape = 's32[1]{0}', space=sflag, size = 0x4, scoped, tag = 'scoped memory for tpu_custom_call.1']
    #allocation7 [shape = 'u8[4096]{0}', space=vmem, size = 0x1000, scoped, tag = 'output window, operand 0, single buffered']
    %14 = vsyncpa [#allocation3], 0
    %15 = vsyncpa [#allocation6], 0
    %16 = vsyncpa [#allocation4], 0
    // Predicated region
    $region2: #{tpu_custom_call.1} parent=1 // pred_check
      _
    $region3: #{tpu_custom_call.1} parent=1 // pred_check_branch
      %18 = sbr.rel (0) target = $region5
    $region4: #{tpu_custom_call.1} parent=1 // pred_region
      _
    $region5: #{tpu_custom_call.1} parent=1 // pred_fallthru
      _
    // Predicated region
    $region6: #{tpu_custom_call.1} parent=1 // pred_check
      _
    $region7: #{tpu_custom_call.1} parent=1 // pred_check_branch
      %20 = sbr.rel (0) target = $region9
    $region8: #{tpu_custom_call.1} parent=1 // pred_region
      %s22 = ssub.s32 32, 32
      %23 = vsyncadd [#allocation3], %s22
      %s25 = sshll.u32 [#allocation2], 4
      %s26 = int_to_ptr.vmem [resolvable:$true] %s25
      %28 = dma.hbm_to_vmem [thread:$0]  %s1, 32, %s26, [#allocation3]
    $region9: #{tpu_custom_call.1} parent=1 // pred_fallthru
      _
    // Predicated region
    $region10: #{tpu_custom_call.1} parent=1 // pred_check
      _
    $region11: #{tpu_custom_call.1} parent=1 // pred_check_branch
      %30 = sbr.rel (0) target = $region13
    $region12: #{tpu_custom_call.1} parent=1 // pred_region
      _
    $region13: #{tpu_custom_call.1} parent=1 // pred_fallthru
      _
    // Predicated region
    $region14: #{tpu_custom_call.1} parent=1 // pred_check
      _
    $region15: #{tpu_custom_call.1} parent=1 // pred_check_branch
      %32 = sbr.rel (0) target = $region17
    $region16: #{tpu_custom_call.1} parent=1 // pred_region
      _
    $region17: #{tpu_custom_call.1} parent=1 // pred_fallthru
      _
    // Predicated region
    $region18: #{tpu_custom_call.1} parent=1 // pred_check
      _
    $region19: #{tpu_custom_call.1} parent=1 // pred_check_branch
      %34 = sbr.rel (0) target = $region21
    $region20: #{tpu_custom_call.1} parent=1 // pred_region
      %s36 = ssub.s32 16, 16
      %37 = vsyncadd [#allocation6], %s36
      %s39 = sshll.u32 [#allocation5], 4
      %s40 = int_to_ptr.vmem [resolvable:$true] %s39
      %42 = dma.hbm_to_vmem [thread:$0]  %s4, 16, %s40, [#allocation6]
    $region21: #{tpu_custom_call.1} parent=1 // pred_fallthru
      _
    // Predicated region
    $region22: #{tpu_custom_call.1} parent=1 // pred_check
      _
    $region23: #{tpu_custom_call.1} parent=1 // pred_check_branch
      %44 = sbr.rel (0) target = $region25
    $region24: #{tpu_custom_call.1} parent=1 // pred_region
      _
    $region25: #{tpu_custom_call.1} parent=1 // pred_fallthru
      _
    // Predicated region
    $region26: #{tpu_custom_call.1} parent=1 // pred_check
      _
    $region27: #{tpu_custom_call.1} parent=1 // pred_check_branch
      %46 = sbr.rel (0) target = $region29
    $region28: #{tpu_custom_call.1} parent=1 // pred_region
      _
    $region29: #{tpu_custom_call.1} parent=1 // pred_fallthru
      _
    // Predicated region
    $region30: #{tpu_custom_call.1} parent=1 // pred_check
      _
    $region31: #{tpu_custom_call.1} parent=1 // pred_check_branch
      %48 = sbr.rel (0) target = $region33
    $region32: #{tpu_custom_call.1} parent=1 // pred_region
      _
    $region33: #{tpu_custom_call.1} parent=1 // pred_fallthru
      _
    // Predicated region
    $region34: #{tpu_custom_call.1} parent=1 // pred_check
      _
    $region35: #{tpu_custom_call.1} parent=1 // pred_check_branch
      %50 = sbr.rel (0) target = $region37
    $region36: #{tpu_custom_call.1} parent=1 // pred_region
      _
    $region37: #{tpu_custom_call.1} parent=1 // pred_fallthru
      _
    // Predicated region
    $region38: #{tpu_custom_call.1} parent=1 // pred_check
      _
    $region39: #{tpu_custom_call.1} parent=1 // pred_check_branch
      %52 = sbr.rel (0) target = $region41
    $region40: #{tpu_custom_call.1} parent=1 // pred_region
      %53 = dma.done [#allocation3], 32
    $region41: #{tpu_custom_call.1} parent=1 // pred_fallthru
      _
    // Predicated region
    $region42: #{tpu_custom_call.1} parent=1 // pred_check
      _
    $region43: #{tpu_custom_call.1} parent=1 // pred_check_branch
      %55 = sbr.rel (0) target = $region45
    $region44: #{tpu_custom_call.1} parent=1 // pred_region
      %56 = dma.done [#allocation6], 16
    $region45: #{tpu_custom_call.1} parent=1 // pred_fallthru
      _
    %v57 = vld [vmem:[%s0] sm:$0xff]
    %v58 = vld [vmem:[#allocation2] sm:$0x3]
    %v59 = vld [vmem:[%s2] sm:$0x1]
    %61 = vset.pattern.permute.xlu0 0
    %62 = vperm.xlu0 %61, %v57
    %v63 = vpop.permute.xlu0 %62
    %v65 = vlaneseq
    %v66 = vshrl.u32 %v65, 7
    %v67 = vsub.s32 0, %v66
    %v68 = vrot.slane %v58, %v67
    %v69 = vmul.f32 %v63, %v68
    %v71 = vlaneseq
    %v72 = vshrl.u32 %v71, 7
    %v73 = vsub.s32 0, %v72
    %v74 = vrot.slane %v59, %v73
    %v76 = vadd.f32 %v74, %v69
    %77 = vset.pattern.permute.xlu0 1
    %78 = vperm.xlu0 %77, %v57
    %v79 = vpop.permute.xlu0 %78
    %v81 = vlaneseq
    %v82 = vshrl.u32 %v81, 7
    %v83 = vsub.s32 1, %v82
    %v84 = vrot.slane %v58, %v83
    %v85 = vmul.f32 %v79, %v84
    %v86 = vadd.f32 %v76, %v85
    %v87 = vtanh.pop %v86
    %v88 = vld [vmem:[%s3] sm:$0xff]
    %v89 = vld [vmem:[#allocation5] sm:$0x1]
    %v91 = vlaneseq
    %v92 = vshrl.u32 %v91, 7
    %v93 = vsub.s32 0, %v92
    %v94 = vrot.slane %v89, %v93
    %vm96 = vcmask 64512
    %v98 = vsel %vm96, %v87, 0
    %100 = vmatprep.subr.mxu0 0.0
    %101 = vmatpush1.msra.mxu0 %v88
    %102 = vmatprep.subr.mxu0 0.0
    %103 = vmatpush1.msra.mxu0 0.0
    %104 = vmatprep.subr.mxu0 0.0
    %105 = vmatpush1.msra.mxu0 0.0
    %106 = vmatprep.subr.mxu0 0.0
    %107 = vmatpush1.msra.mxu0 0.0
    %108 = vmatprep.subr.mxu0 0.0
    %109 = vmatpush1.msra.mxu0 0.0
    %110 = vmatprep.subr.mxu0 0.0
    %111 = vmatpush1.msra.mxu0 0.0
    %112 = vmatprep.subr.mxu0 0.0
    %113 = vmatpush1.msra.mxu0 0.0
    %114 = vmatprep.subr.mxu0 0.0
    %115 = vmatpush1.msra.mxu0 0.0
    %116 = vmatprep.subr.mxu0 0.0
    %117 = vmatpush1.msra.mxu0 0.0
    %118 = vmatprep.subr.mxu0 0.0
    %119 = vmatpush1.msra.mxu0 0.0
    %120 = vmatprep.subr.mxu0 0.0
    %121 = vmatpush1.msra.mxu0 0.0
    %122 = vmatprep.subr.mxu0 0.0
    %123 = vmatpush1.msra.mxu0 0.0
    %124 = vmatprep.subr.mxu0 0.0
    %125 = vmatpush1.msra.mxu0 0.0
    %126 = vmatprep.subr.mxu0 0.0
    %127 = vmatpush1.msra.mxu0 0.0
    %128 = vmatprep.subr.mxu0 0.0
    %129 = vmatpush1.msra.mxu0 0.0
    %130 = vmatprep.subr.mxu0 0.0
    %131 = vmatpush1.msra.mxu0 0.0
    %132 = vmatprep.subr.mxu0 0.0
    %133 = vmatpush1.msra.mxu0 0.0
    %134 = vmatprep.subr.mxu0 0.0
    %135 = vmatpush1.msra.mxu0 0.0
    %136 = vmatprep.subr.mxu0 0.0
    %137 = vmatpush1.msra.mxu0 0.0
    %138 = vmatprep.subr.mxu0 0.0
    %139 = vmatpush1.msra.mxu0 0.0
    %140 = vmatprep.subr.mxu0 0.0
    %141 = vmatpush1.msra.mxu0 0.0
    %142 = vmatprep.subr.mxu0 0.0
    %143 = vmatpush1.msra.mxu0 0.0
    %144 = vmatprep.subr.mxu0 0.0
    %145 = vmatpush1.msra.mxu0 0.0
    %146 = vmatprep.subr.mxu0 0.0
    %147 = vmatpush1.msra.mxu0 0.0
    %148 = vmatprep.subr.mxu0 0.0
    %149 = vmatpush1.msra.mxu0 0.0
    %150 = vmatprep.subr.mxu0 0.0
    %151 = vmatpush1.msra.mxu0 0.0
    %152 = vmatprep.subr.mxu0 0.0
    %153 = vmatpush1.msra.mxu0 0.0
    %154 = vmatprep.subr.mxu0 0.0
    %155 = vmatpush1.msra.mxu0 0.0
    %156 = vmatprep.subr.mxu0 0.0
    %157 = vmatpush1.msra.mxu0 0.0
    %158 = vmatprep.subr.mxu0 0.0
    %159 = vmatpush1.msra.mxu0 0.0
    %160 = vmatprep.subr.mxu0 0.0
    %161 = vmatpush1.msra.mxu0 0.0
    %162 = vmatprep.subr.mxu0 0.0
    %163 = vmatpush1.msra.mxu0 0.0
    %164 = vmatprep.mubr.f32.mxu0 0.0
    %165 = vmatmul.mubr.f32.gmra.mrb[0].mxu0 %v98
    %v166 = vpop.f32.mrb[0].mxu0
    %v167 = vadd.f32 %v94, %v166
    %v168 = vpop.f32.mrb[0].mxu0
    %169 = vdwg.mxu0
    %v170 = vtanh.pop %v167
    %v171 = vld [vmem:[%s5] sm:$0xff]
    %v172 = vld [vmem:[%s6] sm:$0x1]
    %v174 = vlaneseq
    %v175 = vshrl.u32 %v174, 7
    %v176 = vsub.s32 0, %v175
    %v177 = vrot.slane %v172, %v176
    %v180 = vsel %vm96, %v170, 0
    %182 = vmatprep.subr.mxu0 0.0
    %183 = vmatpush1.msra.mxu0 %v171
    %184 = vmatprep.subr.mxu0 0.0
    %185 = vmatpush1.msra.mxu0 0.0
    %186 = vmatprep.subr.mxu0 0.0
    %187 = vmatpush1.msra.mxu0 0.0
    %188 = vmatprep.subr.mxu0 0.0
    %189 = vmatpush1.msra.mxu0 0.0
    %190 = vmatprep.subr.mxu0 0.0
    %191 = vmatpush1.msra.mxu0 0.0
    %192 = vmatprep.subr.mxu0 0.0
    %193 = vmatpush1.msra.mxu0 0.0
    %194 = vmatprep.subr.mxu0 0.0
    %195 = vmatpush1.msra.mxu0 0.0
    %196 = vmatprep.subr.mxu0 0.0
    %197 = vmatpush1.msra.mxu0 0.0
    %198 = vmatprep.subr.mxu0 0.0
    %199 = vmatpush1.msra.mxu0 0.0
    %200 = vmatprep.subr.mxu0 0.0
    %201 = vmatpush1.msra.mxu0 0.0
    %202 = vmatprep.subr.mxu0 0.0
    %203 = vmatpush1.msra.mxu0 0.0
    %204 = vmatprep.subr.mxu0 0.0
    %205 = vmatpush1.msra.mxu0 0.0
    %206 = vmatprep.subr.mxu0 0.0
    %207 = vmatpush1.msra.mxu0 0.0
    %208 = vmatprep.subr.mxu0 0.0
    %209 = vmatpush1.msra.mxu0 0.0
    %210 = vmatprep.subr.mxu0 0.0
    %211 = vmatpush1.msra.mxu0 0.0
    %212 = vmatprep.subr.mxu0 0.0
    %213 = vmatpush1.msra.mxu0 0.0
    %214 = vmatprep.subr.mxu0 0.0
    %215 = vmatpush1.msra.mxu0 0.0
    %216 = vmatprep.subr.mxu0 0.0
    %217 = vmatpush1.msra.mxu0 0.0
    %218 = vmatprep.subr.mxu0 0.0
    %219 = vmatpush1.msra.mxu0 0.0
    %220 = vmatprep.subr.mxu0 0.0
    %221 = vmatpush1.msra.mxu0 0.0
    %222 = vmatprep.subr.mxu0 0.0
    %223 = vmatpush1.msra.mxu0 0.0
    %224 = vmatprep.subr.mxu0 0.0
    %225 = vmatpush1.msra.mxu0 0.0
    %226 = vmatprep.subr.mxu0 0.0
    %227 = vmatpush1.msra.mxu0 0.0
    %228 = vmatprep.subr.mxu0 0.0
    %229 = vmatpush1.msra.mxu0 0.0
    %230 = vmatprep.subr.mxu0 0.0
    %231 = vmatpush1.msra.mxu0 0.0
    %232 = vmatprep.subr.mxu0 0.0
    %233 = vmatpush1.msra.mxu0 0.0
    %234 = vmatprep.subr.mxu0 0.0
    %235 = vmatpush1.msra.mxu0 0.0
    %236 = vmatprep.subr.mxu0 0.0
    %237 = vmatpush1.msra.mxu0 0.0
    %238 = vmatprep.subr.mxu0 0.0
    %239 = vmatpush1.msra.mxu0 0.0
    %240 = vmatprep.subr.mxu0 0.0
    %241 = vmatpush1.msra.mxu0 0.0
    %242 = vmatprep.subr.mxu0 0.0
    %243 = vmatpush1.msra.mxu0 0.0
    %244 = vmatprep.subr.mxu0 0.0
    %245 = vmatpush1.msra.mxu0 0.0
    %246 = vmatprep.mubr.f32.mxu0 0.0
    %247 = vmatmul.mubr.f32.gmra.mrb[0].mxu0 %v180
    %v248 = vpop.f32.mrb[0].mxu0
    %v249 = vadd.f32 %v177, %v248
    %v250 = vpop.f32.mrb[0].mxu0
    %251 = vdwg.mxu0
    %v252 = vtanh.pop %v249
    %v253 = vld [vmem:[%s7] sm:$0xff]
    %v254 = vld [vmem:[%s8] sm:$0x1]
    %v256 = vlaneseq
    %v257 = vshrl.u32 %v256, 7
    %v258 = vsub.s32 0, %v257
    %v259 = vrot.slane %v254, %v258
    %v262 = vsel %vm96, %v252, 0
    %264 = vmatprep.subr.mxu0 0.0
    %265 = vmatpush1.msra.mxu0 %v253
    %266 = vmatprep.subr.mxu0 0.0
    %267 = vmatpush1.msra.mxu0 0.0
    %268 = vmatprep.subr.mxu0 0.0
    %269 = vmatpush1.msra.mxu0 0.0
    %270 = vmatprep.subr.mxu0 0.0
    %271 = vmatpush1.msra.mxu0 0.0
    %272 = vmatprep.subr.mxu0 0.0
    %273 = vmatpush1.msra.mxu0 0.0
    %274 = vmatprep.subr.mxu0 0.0
    %275 = vmatpush1.msra.mxu0 0.0
    %276 = vmatprep.subr.mxu0 0.0
    %277 = vmatpush1.msra.mxu0 0.0
    %278 = vmatprep.subr.mxu0 0.0
    %279 = vmatpush1.msra.mxu0 0.0
    %280 = vmatprep.subr.mxu0 0.0
    %281 = vmatpush1.msra.mxu0 0.0
    %282 = vmatprep.subr.mxu0 0.0
    %283 = vmatpush1.msra.mxu0 0.0
    %284 = vmatprep.subr.mxu0 0.0
    %285 = vmatpush1.msra.mxu0 0.0
    %286 = vmatprep.subr.mxu0 0.0
    %287 = vmatpush1.msra.mxu0 0.0
    %288 = vmatprep.subr.mxu0 0.0
    %289 = vmatpush1.msra.mxu0 0.0
    %290 = vmatprep.subr.mxu0 0.0
    %291 = vmatpush1.msra.mxu0 0.0
    %292 = vmatprep.subr.mxu0 0.0
    %293 = vmatpush1.msra.mxu0 0.0
    %294 = vmatprep.subr.mxu0 0.0
    %295 = vmatpush1.msra.mxu0 0.0
    %296 = vmatprep.subr.mxu0 0.0
    %297 = vmatpush1.msra.mxu0 0.0
    %298 = vmatprep.subr.mxu0 0.0
    %299 = vmatpush1.msra.mxu0 0.0
    %300 = vmatprep.subr.mxu0 0.0
    %301 = vmatpush1.msra.mxu0 0.0
    %302 = vmatprep.subr.mxu0 0.0
    %303 = vmatpush1.msra.mxu0 0.0
    %304 = vmatprep.subr.mxu0 0.0
    %305 = vmatpush1.msra.mxu0 0.0
    %306 = vmatprep.subr.mxu0 0.0
    %307 = vmatpush1.msra.mxu0 0.0
    %308 = vmatprep.subr.mxu0 0.0
    %309 = vmatpush1.msra.mxu0 0.0
    %310 = vmatprep.subr.mxu0 0.0
    %311 = vmatpush1.msra.mxu0 0.0
    %312 = vmatprep.subr.mxu0 0.0
    %313 = vmatpush1.msra.mxu0 0.0
    %314 = vmatprep.subr.mxu0 0.0
    %315 = vmatpush1.msra.mxu0 0.0
    %316 = vmatprep.subr.mxu0 0.0
    %317 = vmatpush1.msra.mxu0 0.0
    %318 = vmatprep.subr.mxu0 0.0
    %319 = vmatpush1.msra.mxu0 0.0
    %320 = vmatprep.subr.mxu0 0.0
    %321 = vmatpush1.msra.mxu0 0.0
    %322 = vmatprep.subr.mxu0 0.0
    %323 = vmatpush1.msra.mxu0 0.0
    %324 = vmatprep.subr.mxu0 0.0
    %325 = vmatpush1.msra.mxu0 0.0
    %326 = vmatprep.subr.mxu0 0.0
    %327 = vmatpush1.msra.mxu0 0.0
    %328 = vmatprep.mubr.f32.mxu0 0.0
    %329 = vmatmul.mubr.f32.gmra.mrb[0].mxu0 %v262
    %v330 = vpop.f32.mrb[0].mxu0
    %v331 = vadd.f32 %v259, %v330
    %v332 = vpop.f32.mrb[0].mxu0
    %333 = vdwg.mxu0
    %334 = vst [vmem:[#allocation7] sm:$0xff] %v331
    // Predicated region
    $region46: #{tpu_custom_call.1} parent=1 // pred_check
      _
    $region47: #{tpu_custom_call.1} parent=1 // pred_check_branch
      %336 = sbr.rel (0) target = $region49
    $region48: #{tpu_custom_call.1} parent=1 // pred_region
      %s338 = ssub.s32 128, 128
      %339 = vsyncadd [#allocation4], %s338
      %s341 = sshll.u32 [#allocation7], 4
      %s342 = int_to_ptr.vmem [resolvable:$true] %s341
      %344 = dma.vmem_to_hbm [thread:$0]  %s342, 128, %s9, [#allocation4]
    $region49: #{tpu_custom_call.1} parent=1 // pred_fallthru
      _
    // Predicated region
    $region50: #{tpu_custom_call.1} parent=1 // pred_check
      _
    $region51: #{tpu_custom_call.1} parent=1 // pred_check_branch
      %346 = sbr.rel (0) target = $region53
    $region52: #{tpu_custom_call.1} parent=1 // pred_region
      %347 = dma.done [#allocation4], 128
    $region53: #{tpu_custom_call.1} parent=1 // pred_fallthru
      _
    %348 = vsyncpa [#allocation3], 1
    %349 = vsyncpa [#allocation6], 1
    %350 = vsyncpa [#allocation4], 1

</llo_original>
